<compile_context>
chip_gen: v6e
topology: v6e:2x2x1
jax: 0.10.0
libtpu: 0.0.40
codegen_flags: <defaults>
</compile_context>

<pallas_src>
import functools

import jax
import jax.numpy as jnp
from jax.experimental import pallas as pl
from jax.experimental.pallas import tpu as pltpu

_LANE = 128
_MiB = 1 << 20


def _scaleup_kernel(scale_ref, x_ref, o_ref):
    # scale_ref: (1, 1) f32 in SMEM; x_ref/o_ref: (tile_rows, width) VMEM tiles.
    s = scale_ref[0, 0]
    o_ref[...] = (x_ref[...].astype(jnp.float32) * s).astype(o_ref.dtype)


def _target_block_bytes() -> int:
    """Per-generation target bytes per operand block."""
    try:
        kind = jax.devices()[0].device_kind.lower()
    except Exception:
        return 4 * _MiB
    if ("v5 lite" in kind) or ("v5e" in kind) or ("v5lite" in kind):
        # v5e: 16 MiB default scoped VMEM; 2 bufs x 2 operands x 3 MiB = 12 MiB.
        return 3 * _MiB
    if ("v7" in kind) or ("7x" in kind):
        # v7x: fastest HBM -> bigger blocks to amortize fixed per-step overhead.
        return 8 * _MiB
    return 4 * _MiB  # v6e and default


def _pick_width(n_elems: int) -> int:
    """Widest lane dim in {1024, 512, 256, 128} that divides n_elems."""
    for k in (8, 4, 2, 1):
        if n_elems % (k * _LANE) == 0:
            return k * _LANE
    raise AssertionError("n_elems must be a multiple of 128")


def _scale_slab(x2d, scale2d, out_dtype, donate_input):
    rows, width = x2d.shape
    in_itemsize = x2d.dtype.itemsize
    out_itemsize = jnp.dtype(out_dtype).itemsize
    bytes_per_row = width * max(in_itemsize, out_itemsize)
    slab_bytes = rows * bytes_per_row

    if slab_bytes <= 1 * _MiB:
        # Tiny slab: a single block (== full array dims) is fine.
        tile_rows = rows
    else:
        target = _target_block_bytes()
        cap_rows = max(8, (target // bytes_per_row) // 8 * 8)      # byte-based cap
        quarter_rows = max(8, (rows // 4) // 8 * 8)                # keep grid >= ~4
        tile_rows = min(cap_rows, quarter_rows)
    grid = pl.cdiv(rows, tile_rows)

    block_bytes = tile_rows * bytes_per_row
    # Double-buffered input + output blocks, plus headroom.
    vmem_limit = max(32 * _MiB, 4 * block_bytes + 8 * _MiB)

    aliases = {}
    if donate_input and x2d.dtype == jnp.dtype(out_dtype):
        aliases = {1: 0}  # alias x slab to the output slab

    return pl.pallas_call(
        _scaleup_kernel,
        out_shape=jax.ShapeDtypeStruct((rows, width), out_dtype),
        grid_spec=pltpu.PrefetchScalarGridSpec(
            num_scalar_prefetch=0,
            grid=(grid,),
            in_specs=[
                pl.BlockSpec(memory_space=pltpu.MemorySpace.SMEM),   # scalar scale
                pl.BlockSpec((tile_rows, width), lambda i: (i, 0)),  # x tile
            ],
            out_specs=pl.BlockSpec((tile_rows, width), lambda i: (i, 0)),
        ),
        compiler_params=pltpu.CompilerParams(
            dimension_semantics=("parallel",),
            vmem_limit_bytes=vmem_limit,
        ),
        cost_estimate=pl.CostEstimate(
            flops=rows * width,
            transcendentals=0,
            bytes_accessed=rows * width * (in_itemsize + out_itemsize),
        ),
        input_output_aliases=aliases,
    )(scale2d, x2d)


@functools.partial(jax.jit, static_argnames=("donate_input",))
def scale_up(x: jax.Array, scale: jax.Array, *, donate_input: bool = False) -> jax.Array:
    """y = x * scale (scalar learned parameter)."""
    orig_shape = x.shape
    in_dtype = x.dtype
    # PyTorch promotion: a 0-dim f32 Parameter does not promote a float tensor
    # (result keeps x's float dtype); int/bool tensors promote to float32.
    if jnp.issubdtype(in_dtype, jnp.floating):
        out_dtype = in_dtype
    else:
        out_dtype = jnp.float32

    scale2d = jnp.asarray(scale, dtype=jnp.float32).reshape(1, 1)

    n = x.size
    x_flat = jnp.ravel(x)
    n_aligned = (n // _LANE) * _LANE

    if n_aligned == 0:
        # Fewer than 128 elements: not worth a kernel launch.
        return (x.astype(jnp.float32) * scale2d[0, 0]).astype(out_dtype)

    if n_aligned == n:
        width = _pick_width(n)
        out2d = _scale_slab(x_flat.reshape(n // width, width), scale2d,
                            out_dtype, donate_input)
        return out2d.reshape(orig_shape)

    # Ragged tail (< 128 elems): kernel on the 128-aligned prefix, plain JAX on
    # the tail. Avoids the full-tensor pad + post-slice HBM passes of the old path.
    # TODO(synk): fold the tail into the last block with an in-kernel masked
    # store (true n via SMEM) to also avoid the concatenate write pass.
    width = _pick_width(n_aligned)
    prefix = x_flat[:n_aligned].reshape(n_aligned // width, width)
    tail = x_flat[n_aligned:]
    out_prefix = _scale_slab(prefix, scale2d, out_dtype, donate_input=False).reshape(-1)
    out_tail = (tail.astype(jnp.float32) * scale2d[0, 0]).astype(out_dtype)
    return jnp.concatenate([out_prefix, out_tail]).reshape(orig_shape)


if __name__ == "__main__":
    key = jax.random.PRNGKey(0)
    # NCHW input, small shapes: batch=2, channels=4, spatial=16x16
    x = jax.random.normal(key, (2, 4, 16, 16), dtype=jnp.float32)

    # Deterministic parameter init matching ScaleUp(scale): a scalar parameter.
    scale = jnp.array(2.0, dtype=jnp.float32)

    y = scale_up(x, scale)
    jax.block_until_ready(y)
    y_ref = x * scale
    assert y.shape == x.shape and y.dtype == x.dtype
    assert jnp.allclose(y, y_ref, rtol=1e-6, atol=1e-6)

    # Ragged path (n % 128 != 0) with a non-empty aligned prefix.
    x_rag = jax.random.normal(jax.random.PRNGKey(1), (5, 131), dtype=jnp.float32)
    y_rag = scale_up(x_rag, scale)
    jax.block_until_ready(y_rag)
    assert jnp.allclose(y_rag, x_rag * scale, rtol=1e-6, atol=1e-6)

    # bf16 path (compute in f32, cast back to bf16, matching PyTorch promotion).
    x_bf = jax.random.normal(jax.random.PRNGKey(2), (2, 4, 16, 16)).astype(jnp.bfloat16)
    y_bf = scale_up(x_bf, scale)
    jax.block_until_ready(y_bf)
    assert y_bf.dtype == jnp.bfloat16
    assert jnp.allclose(y_bf.astype(jnp.float32),
                        x_bf.astype(jnp.float32) * scale, rtol=1e-2, atol=1e-2)

    print("KERNEL_OK")
</pallas_src>

<mosaic_0001>
module attributes {stable_mosaic.version = 11 : i64} {
  func.func @_scaleup_kernel(%arg0: i32, %arg1: memref<1x1xf32, #tpu.memory_space<smem>>, %arg2: memref<2x1024xf32, #tpu.memory_space<vmem>>, %arg3: memref<2x1024xf32, #tpu.memory_space<vmem>>) attributes {dimension_semantics = [#tpu.dimension_semantics<parallel>], iteration_bounds = array<i64: 1>, scalar_prefetch = 0 : i64, scratch_operands = 0 : i64, tpu.core_type = #tpu.core_type<tc>, window_params = [{transform_indices = @transform_0, window_bounds = array<i64: 1, 1>}, {transform_indices = @transform_1, window_bounds = array<i64: 2, 1024>}, {transform_indices = @transform_2, window_bounds = array<i64: 2, 1024>}]} {
    %c0 = arith.constant 0 : index
    %c0_0 = arith.constant 0 : index
    %0 = memref.load %arg1[%c0, %c0_0] : memref<1x1xf32, #tpu.memory_space<smem>>
    %c0_1 = arith.constant 0 : index
    %c0_2 = arith.constant 0 : index
    %1 = vector.load %arg2[%c0_1, %c0_2] : memref<2x1024xf32, #tpu.memory_space<vmem>>, vector<2x1024xf32>
    %2 = vector.broadcast %0 : f32 to vector<2x1024xf32>
    %3 = arith.mulf %1, %2 : vector<2x1024xf32>
    %c0_3 = arith.constant 0 : index
    %c0_4 = arith.constant 0 : index
    %4 = vector.load %arg3[%c0_3, %c0_4] : memref<2x1024xf32, #tpu.memory_space<vmem>>, vector<2x1024xf32>
    tpu.vector_store %arg3[%c0_3, %c0_4], %3 {strides = array<i32>} : memref<2x1024xf32, #tpu.memory_space<vmem>>, vector<2x1024xf32>,
    return
  }
  func.func @transform_0(%arg0: i32) -> (i32, i32) {
    %c0_i32 = arith.constant 0 : i32
    %c0_i32_0 = arith.constant 0 : i32
    %c0_i32_1 = arith.constant 0 : i32
    return %c0_i32, %c0_i32_0 : i32, i32
  }
  func.func @transform_1(%arg0: i32) -> (i32, i32) {
    %c0_i32 = arith.constant 0 : i32
    %c0_i32_0 = arith.constant 0 : i32
    return %arg0, %c0_i32 : i32, i32
  }
  func.func @transform_2(%arg0: i32) -> (i32, i32) {
    %c0_i32 = arith.constant 0 : i32
    %c0_i32_0 = arith.constant 0 : i32
    return %arg0, %c0_i32 : i32, i32
  }
}

</mosaic_0001>

<llo_original>
// kernel: scale_up.1
$region0: #{scale_up.1}
  #allocation0 [shape = 'u32[]', space=smem, size = 0x4, offset = 0x4, fixed_abs, tag = 'smem constant byte address 0x4 - core index']
  #allocation1 [shape = 'u32[144,128]{1,0:T(1,128)}', space=vmem, size = 0x12000, scoped, tag = 'internal scratch']
  #allocation2 [shape = 'f32[1,1]{1,0:T(1,128)S(6)}', space=smem, size = 0x200, scoped, tag = 'scoped memory for scale_up.1']
  %s0 = inlined_call_operand.<no memory space> [shape: f32[1,1], index: 0, kind: input, shape index: {}]
  %s1 = inlined_call_operand.vmem [shape: f32[2,1024], index: 1, kind: input, shape index: {}]
  %s2 = inlined_call_operand.vmem [shape: f32[2,1024], index: 2, kind: output, shape index: {}]
  %s3 = sld [smem:[#allocation0]]
  $region18: #{scale_up.1} parent=0
    _
  %s5 = ssub.s32 1, %s3
  %s6 = scalar_select 0, %s5, %s3
  %7 = sst [smem:[#allocation2]] %s0
  // Predicated region
  $region2: #{scale_up.1} parent=0 // pred_check
    _
  $region3: #{scale_up.1} parent=0 // pred_check_branch
    %9 = sbr.rel (0) target = $region5
  $region4: #{scale_up.1} parent=0 // pred_region
    _
  $region5: #{scale_up.1} parent=0 // pred_fallthru
    _
  // Predicated region
  $region6: #{scale_up.1} parent=0 // pred_check
    _
  $region7: #{scale_up.1} parent=0 // pred_check_branch
    %11 = sbr.rel (0) target = $region9
  $region8: #{scale_up.1} parent=0 // pred_region
    _
  $region9: #{scale_up.1} parent=0 // pred_fallthru
    _
  %s12 = sld [smem:[#allocation2]]
  %v13 = vld [vmem:[%s1] sm:$0xff]
  %v14 = vld [vmem:[%s1 + $0x8] sm:$0xff]
  %v15 = vstv %s12
  %v16 = vmul.f32 %v13, %v15
  %v17 = vmul.f32 %v14, %v15
  %18 = vst [vmem:[%s2] sm:$0xff] %v16
  %19 = vst [vmem:[%s2 + $0x8] sm:$0xff] %v17
  // Predicated region
  $region10: #{scale_up.1} parent=0 // pred_check
    _
  $region11: #{scale_up.1} parent=0 // pred_check_branch
    %21 = sbr.rel (0) target = $region13
  $region12: #{scale_up.1} parent=0 // pred_region
    _
  $region13: #{scale_up.1} parent=0 // pred_fallthru
    _
  // Predicated region
  $region14: #{scale_up.1} parent=0 // pred_check
    _
  $region15: #{scale_up.1} parent=0 // pred_check_branch
    %23 = sbr.rel (0) target = $region17
  $region16: #{scale_up.1} parent=0 // pred_region
    _
  $region17: #{scale_up.1} parent=0 // pred_fallthru
    _

</llo_original>
